<compile_context>
chip_gen: v7x
topology: tpu7x:2x2x1
jax: 0.10.0
libtpu: 0.0.40
codegen_flags: <defaults>
</compile_context>

<pallas_src>
import functools
import math

import jax
import jax.numpy as jnp
from jax.experimental import pallas as pl
from jax.experimental.pallas import tpu as pltpu


def _make_kernel(norm: bool):
    def kernel(x_ref, w_ref, o_ref):
        # x_ref: [pt, n, c_in], w_ref: [pt, c_in, c_out], o_ref: [pt, n, c_out]
        x = x_ref[...]
        w = w_ref[...]
        if norm:
            # F.normalize(fc_bin, dim=1): normalize each output column over c_in.
            # Compute in f32 and use rsqrt; clamping sumsq at 1e-24 is equivalent to
            # clamping the norm at PyTorch's eps=1e-12.
            w32 = w.astype(jnp.float32)
            sumsq = jnp.sum(w32 * w32, axis=1, keepdims=True)  # [pt, 1, c_out]
            w = (w32 * jax.lax.rsqrt(jnp.maximum(sumsq, 1e-24))).astype(w_ref.dtype)
        out = jnp.einsum("pnc,pco->pno", x, w, preferred_element_type=jnp.float32)
        o_ref[...] = out.astype(o_ref.dtype)

    return kernel


def _choose_p_tile(p, n, c_in, c_out, itemsize, vmem_budget_bytes=8 * 1024 * 1024):
    """Largest part-tile whose double-buffered working set fits a conservative VMEM budget
    (safe on v7x's 64 MiB), capped so the grid keeps >= 2 steps for megacore sharding."""
    per_part = (n * c_in + c_in * c_out + n * c_out) * itemsize
    max_by_vmem = max(1, vmem_budget_bytes // (2 * per_part))  # x2: double buffering
    max_by_grid = max(1, (p + 1) // 2)  # ceil(p/2): at least 2 grid steps when p >= 2
    return int(min(p, max_by_vmem, max_by_grid))


def _separate_fcs_part_major(xp, fc_bin, norm):
    p, n, c_in = xp.shape
    p_w, c_in_w, c_out = fc_bin.shape
    assert p == p_w and c_in == c_in_w

    itemsize = jnp.dtype(xp.dtype).itemsize
    p_tile = _choose_p_tile(p, n, c_in, c_out, itemsize)
    p_pad = pl.cdiv(p, p_tile) * p_tile
    if p_pad != p:
        xp = jnp.pad(xp, ((0, p_pad - p), (0, 0), (0, 0)))
        fc_bin = jnp.pad(fc_bin, ((0, p_pad - p), (0, 0), (0, 0)))

    cost = pl.CostEstimate(
        flops=2 * p * n * c_in * c_out,
        transcendentals=p * c_out if norm else 0,
        bytes_accessed=itemsize * (p * c_in * c_out + p * n * c_in + p * n * c_out),
    )

    out = pl.pallas_call(
        _make_kernel(norm),
        out_shape=jax.ShapeDtypeStruct((p_pad, n, c_out), xp.dtype),
        grid_spec=pltpu.PrefetchScalarGridSpec(
            num_scalar_prefetch=0,
            grid=(p_pad // p_tile,),
            in_specs=[
                pl.BlockSpec((p_tile, n, c_in), lambda i: (i, 0, 0)),
                pl.BlockSpec((p_tile, c_in, c_out), lambda i: (i, 0, 0)),
            ],
            out_specs=pl.BlockSpec((p_tile, n, c_out), lambda i: (i, 0, 0)),
        ),
        compiler_params=pltpu.CompilerParams(
            dimension_semantics=("parallel",),
            vmem_limit_bytes=32 * 1024 * 1024,
        ),
        cost_estimate=cost,
    )(xp, fc_bin)

    return out[:p] if p_pad != p else out


@functools.partial(jax.jit, static_argnames=("norm",))
def separate_fcs_part_major(xp, fc_bin, norm=False):
    """Part-major variant: xp [p, n, c_in] -> [p, n, c_out]; skips wrapper transposes."""
    return _separate_fcs_part_major(xp, fc_bin, norm)


@functools.partial(jax.jit, static_argnames=("norm",))
def separate_fcs(x, fc_bin, norm=False):
    """x: [n, c_in, p], fc_bin: [p, c_in, c_out] -> out: [n, c_out, p] (PyTorch layout).

    The two transposes below are each an extra HBM pass; callers that can keep a part-major
    [p, n, c] activation layout should use separate_fcs_part_major instead.
    """
    xp = jnp.transpose(x, (2, 0, 1))                  # [p, n, c_in]
    out = _separate_fcs_part_major(xp, fc_bin, norm)  # [p, n, c_out]
    return jnp.transpose(out, (1, 2, 0))              # [n, c_out, p]


def xavier_uniform(key, shape, dtype=jnp.float32):
    # PyTorch xavier_uniform_ on a 3-D tensor (p, c_in, c_out):
    #   fan_in = c_in * c_out, fan_out = p * c_out, bound = sqrt(6 / (fan_in + fan_out))
    p, c_in, c_out = shape
    fan_in = c_in * c_out
    fan_out = p * c_out
    bound = math.sqrt(6.0 / (fan_in + fan_out))
    return jax.random.uniform(key, shape, dtype=dtype, minval=-bound, maxval=bound)


if __name__ == "__main__":
    key = jax.random.PRNGKey(0)
    k_x, k_w = jax.random.split(key)

    # Small shapes consistent with the module (batch, in/out channels, parts).
    # c_out=128 keeps the output block lane-dense, matching real SeparateFCs configs.
    n, c_in, c_out, p = 4, 64, 128, 16

    x = jax.random.normal(k_x, (n, c_in, p), dtype=jnp.float32)
    fc_bin = xavier_uniform(k_w, (p, c_in, c_out))

    for norm in (False, True):
        out = separate_fcs(x, fc_bin, norm=norm)
        out = jax.block_until_ready(out)
        assert out.shape == (n, c_out, p), out.shape

        # Pure-JAX reference for correctness check.
        w = fc_bin
        if norm:
            w = w / jnp.maximum(
                jnp.sqrt(jnp.sum(w * w, axis=1, keepdims=True)), 1e-12
            )
        ref = jnp.einsum("ncp,pco->nop", x, w)
        # Tolerance accounts for MXU default-precision / accumulation-order differences.
        assert jnp.allclose(out, ref, atol=1e-2, rtol=1e-2), (
            f"mismatch (norm={norm}): max abs diff {jnp.max(jnp.abs(out - ref))}"
        )

    print("KERNEL_OK")
</pallas_src>

<mosaic_0001>
module attributes {stable_mosaic.version = 11 : i64} {
  func.func @kernel(%arg0: i32, %arg1: memref<8x4x64xf32, #tpu.memory_space<vmem>>, %arg2: memref<8x64x128xf32, #tpu.memory_space<vmem>>, %arg3: memref<8x4x128xf32, #tpu.memory_space<vmem>>) attributes {dimension_semantics = [#tpu.dimension_semantics<parallel>], iteration_bounds = array<i64: 2>, scalar_prefetch = 0 : i64, scratch_operands = 0 : i64, tpu.core_type = #tpu.core_type<tc>, window_params = [{transform_indices = @transform_0, window_bounds = array<i64: 8, 4, 64>}, {transform_indices = @transform_1, window_bounds = array<i64: 8, 64, 128>}, {transform_indices = @transform_2, window_bounds = array<i64: 8, 4, 128>}]} {
    %c0 = arith.constant 0 : index
    %c0_0 = arith.constant 0 : index
    %c0_1 = arith.constant 0 : index
    %0 = vector.load %arg1[%c0, %c0_0, %c0_1] : memref<8x4x64xf32, #tpu.memory_space<vmem>>, vector<8x4x64xf32>
    %c0_2 = arith.constant 0 : index
    %c0_3 = arith.constant 0 : index
    %c0_4 = arith.constant 0 : index
    %1 = vector.load %arg2[%c0_2, %c0_3, %c0_4] : memref<8x64x128xf32, #tpu.memory_space<vmem>>, vector<8x64x128xf32>
    "tpu.trace_start"() <{level = 10 : i32, message = "pnc,pco->pno"}> : () -> ()
    %cst = arith.constant dense<0.000000e+00> : vector<8x4x128xf32>
    %2 = tpu.matmul %0, %1, %cst {dimension_numbers = #tpu.dot_dimension_numbers<[2], [1], [1], [2], [0, 0, 0, 1, 1, 2], [0], [0]>} : vector<8x4x64xf32>, vector<8x64x128xf32>, vector<8x4x128xf32> -> vector<8x4x128xf32>
    "tpu.trace_stop"() : () -> ()
    %c0_5 = arith.constant 0 : index
    %c0_6 = arith.constant 0 : index
    %c0_7 = arith.constant 0 : index
    %3 = vector.load %arg3[%c0_5, %c0_6, %c0_7] : memref<8x4x128xf32, #tpu.memory_space<vmem>>, vector<8x4x128xf32>
    tpu.vector_store %arg3[%c0_5, %c0_6, %c0_7], %2 {strides = array<i32>} : memref<8x4x128xf32, #tpu.memory_space<vmem>>, vector<8x4x128xf32>,
    return
  }
  func.func @transform_0(%arg0: i32) -> (i32, i32, i32) {
    %c0_i32 = arith.constant 0 : i32
    %c0_i32_0 = arith.constant 0 : i32
    %c0_i32_1 = arith.constant 0 : i32
    return %arg0, %c0_i32, %c0_i32_0 : i32, i32, i32
  }
  func.func @transform_1(%arg0: i32) -> (i32, i32, i32) {
    %c0_i32 = arith.constant 0 : i32
    %c0_i32_0 = arith.constant 0 : i32
    %c0_i32_1 = arith.constant 0 : i32
    return %arg0, %c0_i32, %c0_i32_0 : i32, i32, i32
  }
  func.func @transform_2(%arg0: i32) -> (i32, i32, i32) {
    %c0_i32 = arith.constant 0 : i32
    %c0_i32_0 = arith.constant 0 : i32
    %c0_i32_1 = arith.constant 0 : i32
    return %arg0, %c0_i32, %c0_i32_0 : i32, i32, i32
  }
}

</mosaic_0001>

<llo_original>
// kernel: separate_fcs.1
$region0: #{separate_fcs.1}
  #allocation0 [shape = 'u32[]', space=smem, size = 0x4, offset = 0x4, fixed_abs, tag = 'smem constant byte address 0x4 - core index']
  #allocation1 [shape = 'u32[144,128]{1,0:T(1,128)}', space=vmem, size = 0x12000, scoped, tag = 'internal scratch']
  %s0 = inlined_call_operand.vmem [shape: f32[16,4,64], index: 0, kind: input, shape index: {}]
  %s1 = inlined_call_operand.hbm [shape: f32[16,64,128], index: 1, kind: input, shape index: {}]
  %s2 = inlined_call_operand.vmem [shape: f32[16,4,128], index: 2, kind: output, shape index: {}]
  %s3 = sld [smem:[#allocation0]]
  $region45: #{separate_fcs.1} parent=0
    _
  %s5 = ssub.s32 1, %s3
  %s6 = scalar_select 0, %s5, %s3
  $region1: #{separate_fcs.1} parent=0
    #allocation2 [shape = 'u8[524288]{0}', space=vmem, size = 0x80000, scoped, tag = 'input window, operand 1']
    #allocation3 [shape = 's32[2]{0}', space=sflag, size = 0x8, scoped, tag = 'scoped memory for separate_fcs.1']
    %7 = vsyncpa [#allocation3], 0
    %s8 = scalar_lea.sflag [#allocation3], 1
    %9 = vsyncpa %s8, 0
    loop: start=0, step=1, limit=4
    $region2: #{separate_fcs.1} parent=1 // loop_pre_header
      _
    $region3: #{separate_fcs.1} parent=1 // loop_header
      %s11 = sphi 0, %s15
      %p12 = scmp.ge.s32.totalorder %s11, 4
      %s21 = sphi 0, %s23
      %s24 = sphi 0, %s21
      %s25 = sphi 0, %s24
      %s41 = sphi 0, %s25
      %s47 = sphi 0, %s49
      %s50 = sphi 0, %s47
      %s51 = sphi 0, %s50
      %s67 = sphi 0, %s51
      %s73 = sphi 0, %s75
      %s76 = sphi 0, %s73
      %s77 = sphi 0, %s76
      %s93 = sphi 0, %s77
    $region4: #{separate_fcs.1} parent=1 // loop_header_branch
      %14 = sbr.rel (%p12) target = $region8
    $region5: #{separate_fcs.1} parent=1 // loop_body
      %s16 = ssub.s32 %s11, 1
      %s17 = ssub.s32 %s11, 2
      %s18 = sadd.s32 %s11, 1
      %s19 = ssub.s32 %s11, %s18
      %p20 = scmp.eq.s32.totalorder %s19, 0
      %s22 = sadd.s32 %s21, 1
      %s23 = scalar_select %p20, %s21, %s22
      %p26 = pneg %p20
      %p27 = scmp.eq.s32.totalorder %s11, 1
      %p28 = por %p26, %p27
      %p29 = scmp.ne.s32.totalorder %s21, %s24
      %p30 = scmp.eq.s32.totalorder %s11, 0
      %p31 = por %p29, %p30
      %p32 = scmp.ne.s32.totalorder %s21, %s24
      %p33 = scmp.eq.s32.totalorder %s16, 1
      %p34 = por %p32, %p33
      %p35 = scmp.ne.s32.totalorder %s24, %s25
      %p36 = scmp.eq.s32.totalorder %s16, 0
      %p37 = por %p35, %p36
      %p38 = scmp.ne.s32.totalorder %s24, %s25
      %p39 = scmp.eq.s32.totalorder %s17, 1
      %p40 = por %p38, %p39
      %p42 = scmp.ne.s32.totalorder %s25, %s41
      %p43 = scmp.eq.s32.totalorder %s17, 0
      %p44 = por %p42, %p43
      %s45 = ssub.s32 %s11, %s18
      %p46 = scmp.eq.s32.totalorder %s45, 0
      %s48 = sadd.s32 %s47, 1
      %s49 = scalar_select %p46, %s47, %s48
      %p52 = pneg %p46
      %p53 = scmp.eq.s32.totalorder %s11, 1
      %p54 = por %p52, %p53
      %p55 = scmp.ne.s32.totalorder %s47, %s50
      %p56 = scmp.eq.s32.totalorder %s11, 0
      %p57 = por %p55, %p56
      %p58 = scmp.ne.s32.totalorder %s47, %s50
      %p59 = scmp.eq.s32.totalorder %s16, 1
      %p60 = por %p58, %p59
      %p61 = scmp.ne.s32.totalorder %s50, %s51
      %p62 = scmp.eq.s32.totalorder %s16, 0
      %p63 = por %p61, %p62
      %p64 = scmp.ne.s32.totalorder %s50, %s51
      %p65 = scmp.eq.s32.totalorder %s17, 1
      %p66 = por %p64, %p65
      %p68 = scmp.ne.s32.totalorder %s51, %s67
      %p69 = scmp.eq.s32.totalorder %s17, 0
      %p70 = por %p68, %p69
      %s71 = ssub.s32 %s11, %s18
      %p72 = scmp.eq.s32.totalorder %s71, 0
      %s74 = sadd.s32 %s73, 1
      %s75 = scalar_select %p72, %s73, %s74
      %p78 = pneg %p72
      %p79 = scmp.eq.s32.totalorder %s11, 1
      %p80 = por %p78, %p79
      %p81 = scmp.ne.s32.totalorder %s73, %s76
      %p82 = scmp.eq.s32.totalorder %s11, 0
      %p83 = por %p81, %p82
      %p84 = scmp.ne.s32.totalorder %s73, %s76
      %p85 = scmp.eq.s32.totalorder %s16, 1
      %p86 = por %p84, %p85
      %p87 = scmp.ne.s32.totalorder %s76, %s77
      %p88 = scmp.eq.s32.totalorder %s16, 0
      %p89 = por %p87, %p88
      %p90 = scmp.ne.s32.totalorder %s76, %s77
      %p91 = scmp.eq.s32.totalorder %s17, 1
      %p92 = por %p90, %p91
      %p94 = scmp.ne.s32.totalorder %s77, %s93
      %p95 = scmp.eq.s32.totalorder %s17, 0
      %p96 = por %p94, %p95
      %p97 = scmp.le.s32.totalorder 1, %s11
      %p98 = scmp.lt.s32.totalorder %s11, 3
      %p99 = pnand %p97, %p98
      %p100 = pneg %p99
      // Predicated region
      $region9: #{separate_fcs.1} parent=5 // pred_check
        _
      $region10: #{separate_fcs.1} parent=5 // pred_check_branch
        %102 = sbr.rel (%p99) target = $region12
      $region11: #{separate_fcs.1} parent=5 // pred_region
        %s103 = ssub.s32 %s11, 1
      $region12: #{separate_fcs.1} parent=5 // pred_fallthru
        _
      %p104 = scmp.lt.s32.totalorder %s11, 2
      // Predicated region
      $region13: #{separate_fcs.1} parent=5 // pred_check
        %p105 = pneg %p104
      $region14: #{separate_fcs.1} parent=5 // pred_check_branch
        %107 = sbr.rel (%p105) target = $region16
      $region15: #{separate_fcs.1} parent=5 // pred_region
        // Predicated region
        $region17: #{separate_fcs.1} parent=15 // pred_check
          %p108 = pneg %p31
        $region18: #{separate_fcs.1} parent=15 // pred_check_branch
          %110 = sbr.rel (%p108) target = $region20
        $region19: #{separate_fcs.1} parent=15 // pred_region
          %s111 = smul.u32 8, %s11
          %p112 = scmp.lt.s32.totalorder %s111, 15
          %s113 = scalar_select %p112, %s111, 15
          %s114 = smul.addr %s113, 4
          %s115 = scalar_lea.vmem %s0, %s114
          %s116 = smul.u32 8, %s11
        $region20: #{separate_fcs.1} parent=15 // pred_fallthru
          _
        // Predicated region
        $region21: #{separate_fcs.1} parent=15 // pred_check
          %p117 = pneg %p57
        $region22: #{separate_fcs.1} parent=15 // pred_check_branch
          %119 = sbr.rel (%p117) target = $region24
        $region23: #{separate_fcs.1} parent=15 // pred_region
          %s120 = sand.u32 %s47, 1
          %s121 = scalar_lea.sflag [#allocation3], %s120
          %s122 = sand.u32 %s47, 1
          %s123 = smul.addr %s122, 512
          %s124 = scalar_lea.vmem [#allocation2], %s123
          %s125 = smul.u32 8, %s11
          %s127 = ssub.s32 8192, 8192
          %128 = vsyncadd %s121, %s127
          %s129 = smul.addr %s125, 8
          %s130 = smul.addr %s129, 128
          %s131 = scalar_lea.hbm %s1, %s130
          %s132 = sshll.u32 %s124, 4
          %s133 = int_to_ptr.vmem [resolvable:$true] %s132
          %138 = dma.hbm_to_vmem [thread:$0]  %s131, 8192, %s133, %s121, 128, 128, 8
        $region24: #{separate_fcs.1} parent=15 // pred_fallthru
          _
      $region16: #{separate_fcs.1} parent=5 // pred_fallthru
        _
      %p139 = scmp.le.s32.totalorder 1, %s11
      %p140 = scmp.lt.s32.totalorder %s11, 3
      %p141 = pnand %p139, %p140
      %p142 = pneg %p141
      // Predicated region
      $region25: #{separate_fcs.1} parent=5 // pred_check
        _
      $region26: #{separate_fcs.1} parent=5 // pred_check_branch
        %144 = sbr.rel (%p141) target = $region28
      $region27: #{separate_fcs.1} parent=5 // pred_region
        %s145 = ssub.s32 %s11, 1
        %s146 = sand.u32 %s50, 1
        %s147 = scalar_lea.sflag [#allocation3], %s146
        %s148 = sand.u32 %s50, 1
        %s149 = smul.addr %s148, 512
        %s150 = scalar_lea.vmem [#allocation2], %s149
        // Predicated region
        $region29: #{separate_fcs.1} parent=27 // pred_check
          %p151 = pneg %p63
        $region30: #{separate_fcs.1} parent=27 // pred_check_branch
          %153 = sbr.rel (%p151) target = $region32
        $region31: #{separate_fcs.1} parent=27 // pred_region
          %154 = dma.done %s147, 8192
        $region32: #{separate_fcs.1} parent=27 // pred_fallthru
          _
        %s155 = smul.u32 8, %s16
        %p156 = scmp.lt.s32.totalorder %s155, 15
        %s157 = scalar_select %p156, %s155, 15
        %s158 = smul.addr %s157, 4
        %s159 = scalar_lea.vmem %s0, %s158
        %p160 = pneg %p37
        %p161 = pneg %p34
        %s162 = sand.u32 %s50, 1
        %s163 = scalar_lea.sflag [#allocation3], %s162
        %s164 = sand.u32 %s50, 1
        %s165 = smul.addr %s164, 512
        %s166 = scalar_lea.vmem [#allocation2], %s165
        %p167 = pneg %p63
        %p168 = pneg %p60
        %p169 = pneg %p89
        %p170 = pneg %p86
        %s171 = smul.u32 8, %s16
        %p172 = scmp.lt.s32.totalorder %s171, 15
        %s173 = scalar_select %p172, %s171, 15
        %s174 = smul.addr %s173, 4
        %s175 = scalar_lea.vmem %s2, %s174
        %s176 = smul.u32 8, %s16
        %p177 = scmp.lt.s32.totalorder %s176, 15
        %s178 = scalar_select %p177, %s176, 15
        %s179 = smul.addr %s178, 4
        %s180 = scalar_lea.vmem %s0, %s179
        %s181 = smul.u32 8, %s16
        %s182 = smul.u32 8, %s16
        %s183 = smul.u32 8, %s16
        %p184 = scmp.lt.s32.totalorder %s183, 15
        %s185 = scalar_select %p184, %s183, 15
        %s186 = smul.addr %s185, 4
        %s187 = scalar_lea.vmem %s2, %s186
        %s188 = smul.u32 8, %s16
        %v189 = vld [vmem:[%s180] sm:$0xf]
        %v190 = vld [vmem:[%s180 + $0x4] sm:$0xf]
        %v191 = vld [vmem:[%s180 + $0x8] sm:$0xf]
        %v192 = vld [vmem:[%s180 + $0xc] sm:$0xf]
        %v193 = vld [vmem:[%s180 + $0x10] sm:$0xf]
        %v194 = vld [vmem:[%s180 + $0x14] sm:$0xf]
        %v195 = vld [vmem:[%s180 + $0x18] sm:$0xf]
        %v196 = vld [vmem:[%s180 + $0x1c] sm:$0xf]
        %v197 = vld [vmem:[%s150] sm:$0xff]
        %v198 = vld [vmem:[%s150 + $0x8] sm:$0xff]
        %v199 = vld [vmem:[%s150 + $0x10] sm:$0xff]
        %v200 = vld [vmem:[%s150 + $0x18] sm:$0xff]
        %v201 = vld [vmem:[%s150 + $0x20] sm:$0xff]
        %v202 = vld [vmem:[%s150 + $0x28] sm:$0xff]
        %v203 = vld [vmem:[%s150 + $0x30] sm:$0xff]
        %v204 = vld [vmem:[%s150 + $0x38] sm:$0xff]
        %v205 = vld [vmem:[%s150 + $0x40] sm:$0xff]
        %v206 = vld [vmem:[%s150 + $0x48] sm:$0xff]
        %v207 = vld [vmem:[%s150 + $0x50] sm:$0xff]
        %v208 = vld [vmem:[%s150 + $0x58] sm:$0xff]
        %v209 = vld [vmem:[%s150 + $0x60] sm:$0xff]
        %v210 = vld [vmem:[%s150 + $0x68] sm:$0xff]
        %v211 = vld [vmem:[%s150 + $0x70] sm:$0xff]
        %v212 = vld [vmem:[%s150 + $0x78] sm:$0xff]
        %v213 = vld [vmem:[%s150 + $0x80] sm:$0xff]
        %v214 = vld [vmem:[%s150 + $0x88] sm:$0xff]
        %v215 = vld [vmem:[%s150 + $0x90] sm:$0xff]
        %v216 = vld [vmem:[%s150 + $0x98] sm:$0xff]
        %v217 = vld [vmem:[%s150 + $0xa0] sm:$0xff]
        %v218 = vld [vmem:[%s150 + $0xa8] sm:$0xff]
        %v219 = vld [vmem:[%s150 + $0xb0] sm:$0xff]
        %v220 = vld [vmem:[%s150 + $0xb8] sm:$0xff]
        %v221 = vld [vmem:[%s150 + $0xc0] sm:$0xff]
        %v222 = vld [vmem:[%s150 + $0xc8] sm:$0xff]
        %v223 = vld [vmem:[%s150 + $0xd0] sm:$0xff]
        %v224 = vld [vmem:[%s150 + $0xd8] sm:$0xff]
        %v225 = vld [vmem:[%s150 + $0xe0] sm:$0xff]
        %v226 = vld [vmem:[%s150 + $0xe8] sm:$0xff]
        %v227 = vld [vmem:[%s150 + $0xf0] sm:$0xff]
        %v228 = vld [vmem:[%s150 + $0xf8] sm:$0xff]
        %v229 = vld [vmem:[%s150 + $0x100] sm:$0xff]
        %v230 = vld [vmem:[%s150 + $0x108] sm:$0xff]
        %v231 = vld [vmem:[%s150 + $0x110] sm:$0xff]
        %v232 = vld [vmem:[%s150 + $0x118] sm:$0xff]
        %v233 = vld [vmem:[%s150 + $0x120] sm:$0xff]
        %v234 = vld [vmem:[%s150 + $0x128] sm:$0xff]
        %v235 = vld [vmem:[%s150 + $0x130] sm:$0xff]
        %v236 = vld [vmem:[%s150 + $0x138] sm:$0xff]
        %v237 = vld [vmem:[%s150 + $0x140] sm:$0xff]
        %v238 = vld [vmem:[%s150 + $0x148] sm:$0xff]
        %v239 = vld [vmem:[%s150 + $0x150] sm:$0xff]
        %v240 = vld [vmem:[%s150 + $0x158] sm:$0xff]
        %v241 = vld [vmem:[%s150 + $0x160] sm:$0xff]
        %v242 = vld [vmem:[%s150 + $0x168] sm:$0xff]
        %v243 = vld [vmem:[%s150 + $0x170] sm:$0xff]
        %v244 = vld [vmem:[%s150 + $0x178] sm:$0xff]
        %v245 = vld [vmem:[%s150 + $0x180] sm:$0xff]
        %v246 = vld [vmem:[%s150 + $0x188] sm:$0xff]
        %v247 = vld [vmem:[%s150 + $0x190] sm:$0xff]
        %v248 = vld [vmem:[%s150 + $0x198] sm:$0xff]
        %v249 = vld [vmem:[%s150 + $0x1a0] sm:$0xff]
        %v250 = vld [vmem:[%s150 + $0x1a8] sm:$0xff]
        %v251 = vld [vmem:[%s150 + $0x1b0] sm:$0xff]
        %v252 = vld [vmem:[%s150 + $0x1b8] sm:$0xff]
        %v253 = vld [vmem:[%s150 + $0x1c0] sm:$0xff]
        %v254 = vld [vmem:[%s150 + $0x1c8] sm:$0xff]
        %v255 = vld [vmem:[%s150 + $0x1d0] sm:$0xff]
        %v256 = vld [vmem:[%s150 + $0x1d8] sm:$0xff]
        %v257 = vld [vmem:[%s150 + $0x1e0] sm:$0xff]
        %v258 = vld [vmem:[%s150 + $0x1e8] sm:$0xff]
        %v259 = vld [vmem:[%s150 + $0x1f0] sm:$0xff]
        %v260 = vld [vmem:[%s150 + $0x1f8] sm:$0xff]
        %vm261 = vcmask 523264
        %v263 = vsel %vm261, %v189, 0
        %265 = vmatprep.subr.mxu0 0.0
        %266 = vmatpush1.msra.mxu0 %v197
        %267 = vmatprep.subr.mxu0 0.0
        %268 = vmatpush1.msra.mxu0 %v198
        %269 = vmatprep.subr.mxu0 0.0
        %270 = vmatpush1.msra.mxu0 %v199
        %271 = vmatprep.subr.mxu0 0.0
        %272 = vmatpush1.msra.mxu0 %v200
        %273 = vmatprep.subr.mxu0 0.0
        %274 = vmatpush1.msra.mxu0 %v201
        %275 = vmatprep.subr.mxu0 0.0
        %276 = vmatpush1.msra.mxu0 %v202
        %277 = vmatprep.subr.mxu0 0.0
        %278 = vmatpush1.msra.mxu0 %v203
        %279 = vmatprep.subr.mxu0 0.0
        %280 = vmatpush1.msra.mxu0 %v204
        %281 = vmatprep.subr.mxu0 0.0
        %282 = vmatpush1.msra.mxu0 0.0
        %283 = vmatprep.subr.mxu0 0.0
        %284 = vmatpush1.msra.mxu0 0.0
        %285 = vmatprep.subr.mxu0 0.0
        %286 = vmatpush1.msra.mxu0 0.0
        %287 = vmatprep.subr.mxu0 0.0
        %288 = vmatpush1.msra.mxu0 0.0
        %289 = vmatprep.subr.mxu0 0.0
        %290 = vmatpush1.msra.mxu0 0.0
        %291 = vmatprep.subr.mxu0 0.0
        %292 = vmatpush1.msra.mxu0 0.0
        %293 = vmatprep.subr.mxu0 0.0
        %294 = vmatpush1.msra.mxu0 0.0
        %295 = vmatprep.subr.mxu0 0.0
        %296 = vmatpush1.msra.mxu0 0.0
        %297 = vmatprep.subr.mxu0 0.0
        %298 = vmatpush1.msra.mxu0 0.0
        %299 = vmatprep.subr.mxu0 0.0
        %300 = vmatpush1.msra.mxu0 0.0
        %301 = vmatprep.subr.mxu0 0.0
        %302 = vmatpush1.msra.mxu0 0.0
        %303 = vmatprep.subr.mxu0 0.0
        %304 = vmatpush1.msra.mxu0 0.0
        %305 = vmatprep.subr.mxu0 0.0
        %306 = vmatpush1.msra.mxu0 0.0
        %307 = vmatprep.subr.mxu0 0.0
        %308 = vmatpush1.msra.mxu0 0.0
        %309 = vmatprep.subr.mxu0 0.0
        %310 = vmatpush1.msra.mxu0 0.0
        %311 = vmatprep.subr.mxu0 0.0
        %312 = vmatpush1.msra.mxu0 0.0
        %313 = vmatprep.subr.mxu0 0.0
        %314 = vmatpush1.msra.mxu0 0.0
        %315 = vmatprep.subr.mxu0 0.0
        %316 = vmatpush1.msra.mxu0 0.0
        %317 = vmatprep.subr.mxu0 0.0
        %318 = vmatpush1.msra.mxu0 0.0
        %319 = vmatprep.subr.mxu0 0.0
        %320 = vmatpush1.msra.mxu0 0.0
        %321 = vmatprep.subr.mxu0 0.0
        %322 = vmatpush1.msra.mxu0 0.0
        %323 = vmatprep.subr.mxu0 0.0
        %324 = vmatpush1.msra.mxu0 0.0
        %325 = vmatprep.subr.mxu0 0.0
        %326 = vmatpush1.msra.mxu0 0.0
        %327 = vmatprep.subr.mxu0 0.0
        %328 = vmatpush1.msra.mxu0 0.0
        %329 = vmatprep.mubr.f32.mxu0 0.0
        %330 = vmatmul.mubr.f32.gmra.mrb[0].mxu0 %v263
        %v331 = vpop.f32.mrb[0].mxu0
        %v332 = vadd.f32 0.0, %v331
        %v333 = vpop.f32.mrb[0].mxu0
        %334 = vdwg.mxu0
        %v336 = vsel %vm261, %v190, 0
        %338 = vmatprep.subr.mxu0 0.0
        %339 = vmatpush1.msra.mxu0 %v205
        %340 = vmatprep.subr.mxu0 0.0
        %341 = vmatpush1.msra.mxu0 %v206
        %342 = vmatprep.subr.mxu0 0.0
        %343 = vmatpush1.msra.mxu0 %v207
        %344 = vmatprep.subr.mxu0 0.0
        %345 = vmatpush1.msra.mxu0 %v208
        %346 = vmatprep.subr.mxu0 0.0
        %347 = vmatpush1.msra.mxu0 %v209
        %348 = vmatprep.subr.mxu0 0.0
        %349 = vmatpush1.msra.mxu0 %v210
        %350 = vmatprep.subr.mxu0 0.0
        %351 = vmatpush1.msra.mxu0 %v211
        %352 = vmatprep.subr.mxu0 0.0
        %353 = vmatpush1.msra.mxu0 %v212
        %354 = vmatprep.subr.mxu0 0.0
        %355 = vmatpush1.msra.mxu0 0.0
        %356 = vmatprep.subr.mxu0 0.0
        %357 = vmatpush1.msra.mxu0 0.0
        %358 = vmatprep.subr.mxu0 0.0
        %359 = vmatpush1.msra.mxu0 0.0
        %360 = vmatprep.subr.mxu0 0.0
        %361 = vmatpush1.msra.mxu0 0.0
        %362 = vmatprep.subr.mxu0 0.0
        %363 = vmatpush1.msra.mxu0 0.0
        %364 = vmatprep.subr.mxu0 0.0
        %365 = vmatpush1.msra.mxu0 0.0
        %366 = vmatprep.subr.mxu0 0.0
        %367 = vmatpush1.msra.mxu0 0.0
        %368 = vmatprep.subr.mxu0 0.0
        %369 = vmatpush1.msra.mxu0 0.0
        %370 = vmatprep.subr.mxu0 0.0
        %371 = vmatpush1.msra.mxu0 0.0
        %372 = vmatprep.subr.mxu0 0.0
        %373 = vmatpush1.msra.mxu0 0.0
        %374 = vmatprep.subr.mxu0 0.0
        %375 = vmatpush1.msra.mxu0 0.0
        %376 = vmatprep.subr.mxu0 0.0
        %377 = vmatpush1.msra.mxu0 0.0
        %378 = vmatprep.subr.mxu0 0.0
        %379 = vmatpush1.msra.mxu0 0.0
        %380 = vmatprep.subr.mxu0 0.0
        %381 = vmatpush1.msra.mxu0 0.0
        %382 = vmatprep.subr.mxu0 0.0
        %383 = vmatpush1.msra.mxu0 0.0
        %384 = vmatprep.subr.mxu0 0.0
        %385 = vmatpush1.msra.mxu0 0.0
        %386 = vmatprep.subr.mxu0 0.0
        %387 = vmatpush1.msra.mxu0 0.0
        %388 = vmatprep.subr.mxu0 0.0
        %389 = vmatpush1.msra.mxu0 0.0
        %390 = vmatprep.subr.mxu0 0.0
        %391 = vmatpush1.msra.mxu0 0.0
        %392 = vmatprep.subr.mxu0 0.0
        %393 = vmatpush1.msra.mxu0 0.0
        %394 = vmatprep.subr.mxu0 0.0
        %395 = vmatpush1.msra.mxu0 0.0
        %396 = vmatprep.subr.mxu0 0.0
        %397 = vmatpush1.msra.mxu0 0.0
        %398 = vmatprep.subr.mxu0 0.0
        %399 = vmatpush1.msra.mxu0 0.0
        %400 = vmatprep.subr.mxu0 0.0
        %401 = vmatpush1.msra.mxu0 0.0
        %402 = vmatprep.mubr.f32.mxu0 0.0
        %403 = vmatmul.mubr.f32.gmra.mrb[0].mxu0 %v336
        %v404 = vpop.f32.mrb[0].mxu0
        %v405 = vadd.f32 0.0, %v404
        %v406 = vpop.f32.mrb[0].mxu0
        %407 = vdwg.mxu0
        %v409 = vsel %vm261, %v191, 0
        %411 = vmatprep.subr.mxu0 0.0
        %412 = vmatpush1.msra.mxu0 %v213
        %413 = vmatprep.subr.mxu0 0.0
        %414 = vmatpush1.msra.mxu0 %v214
        %415 = vmatprep.subr.mxu0 0.0
        %416 = vmatpush1.msra.mxu0 %v215
        %417 = vmatprep.subr.mxu0 0.0
        %418 = vmatpush1.msra.mxu0 %v216
        %419 = vmatprep.subr.mxu0 0.0
        %420 = vmatpush1.msra.mxu0 %v217
        %421 = vmatprep.subr.mxu0 0.0
        %422 = vmatpush1.msra.mxu0 %v218
        %423 = vmatprep.subr.mxu0 0.0
        %424 = vmatpush1.msra.mxu0 %v219
        %425 = vmatprep.subr.mxu0 0.0
        %426 = vmatpush1.msra.mxu0 %v220
        %427 = vmatprep.subr.mxu0 0.0
        %428 = vmatpush1.msra.mxu0 0.0
        %429 = vmatprep.subr.mxu0 0.0
        %430 = vmatpush1.msra.mxu0 0.0
        %431 = vmatprep.subr.mxu0 0.0
        %432 = vmatpush1.msra.mxu0 0.0
        %433 = vmatprep.subr.mxu0 0.0
        %434 = vmatpush1.msra.mxu0 0.0
        %435 = vmatprep.subr.mxu0 0.0
        %436 = vmatpush1.msra.mxu0 0.0
        %437 = vmatprep.subr.mxu0 0.0
        %438 = vmatpush1.msra.mxu0 0.0
        %439 = vmatprep.subr.mxu0 0.0
        %440 = vmatpush1.msra.mxu0 0.0
        %441 = vmatprep.subr.mxu0 0.0
        %442 = vmatpush1.msra.mxu0 0.0
        %443 = vmatprep.subr.mxu0 0.0
        %444 = vmatpush1.msra.mxu0 0.0
        %445 = vmatprep.subr.mxu0 0.0
        %446 = vmatpush1.msra.mxu0 0.0
        %447 = vmatprep.subr.mxu0 0.0
        %448 = vmatpush1.msra.mxu0 0.0
        %449 = vmatprep.subr.mxu0 0.0
        %450 = vmatpush1.msra.mxu0 0.0
        %451 = vmatprep.subr.mxu0 0.0
        %452 = vmatpush1.msra.mxu0 0.0
        %453 = vmatprep.subr.mxu0 0.0
        %454 = vmatpush1.msra.mxu0 0.0
        %455 = vmatprep.subr.mxu0 0.0
        %456 = vmatpush1.msra.mxu0 0.0
        %457 = vmatprep.subr.mxu0 0.0
        %458 = vmatpush1.msra.mxu0 0.0
        %459 = vmatprep.subr.mxu0 0.0
        %460 = vmatpush1.msra.mxu0 0.0
        %461 = vmatprep.subr.mxu0 0.0
        %462 = vmatpush1.msra.mxu0 0.0
        %463 = vmatprep.subr.mxu0 0.0
        %464 = vmatpush1.msra.mxu0 0.0
        %465 = vmatprep.subr.mxu0 0.0
        %466 = vmatpush1.msra.mxu0 0.0
        %467 = vmatprep.subr.mxu0 0.0
        %468 = vmatpush1.msra.mxu0 0.0
        %469 = vmatprep.subr.mxu0 0.0
        %470 = vmatpush1.msra.mxu0 0.0
        %471 = vmatprep.subr.mxu0 0.0
        %472 = vmatpush1.msra.mxu0 0.0
        %473 = vmatprep.subr.mxu0 0.0
        %474 = vmatpush1.msra.mxu0 0.0
        %475 = vmatprep.mubr.f32.mxu0 0.0
        %476 = vmatmul.mubr.f32.gmra.mrb[0].mxu0 %v409
        %v477 = vpop.f32.mrb[0].mxu0
        %v478 = vadd.f32 0.0, %v477
        %v479 = vpop.f32.mrb[0].mxu0
        %480 = vdwg.mxu0
        %v482 = vsel %vm261, %v192, 0
        %484 = vmatprep.subr.mxu0 0.0
        %485 = vmatpush1.msra.mxu0 %v221
        %486 = vmatprep.subr.mxu0 0.0
        %487 = vmatpush1.msra.mxu0 %v222
        %488 = vmatprep.subr.mxu0 0.0
        %489 = vmatpush1.msra.mxu0 %v223
        %490 = vmatprep.subr.mxu0 0.0
        %491 = vmatpush1.msra.mxu0 %v224
        %492 = vmatprep.subr.mxu0 0.0
        %493 = vmatpush1.msra.mxu0 %v225
        %494 = vmatprep.subr.mxu0 0.0
        %495 = vmatpush1.msra.mxu0 %v226
        %496 = vmatprep.subr.mxu0 0.0
        %497 = vmatpush1.msra.mxu0 %v227
        %498 = vmatprep.subr.mxu0 0.0
        %499 = vmatpush1.msra.mxu0 %v228
        %500 = vmatprep.subr.mxu0 0.0
        %501 = vmatpush1.msra.mxu0 0.0
        %502 = vmatprep.subr.mxu0 0.0
        %503 = vmatpush1.msra.mxu0 0.0
        %504 = vmatprep.subr.mxu0 0.0
        %505 = vmatpush1.msra.mxu0 0.0
        %506 = vmatprep.subr.mxu0 0.0
        %507 = vmatpush1.msra.mxu0 0.0
        %508 = vmatprep.subr.mxu0 0.0
        %509 = vmatpush1.msra.mxu0 0.0
        %510 = vmatprep.subr.mxu0 0.0
        %511 = vmatpush1.msra.mxu0 0.0
        %512 = vmatprep.subr.mxu0 0.0
        %513 = vmatpush1.msra.mxu0 0.0
        %514 = vmatprep.subr.mxu0 0.0
        %515 = vmatpush1.msra.mxu0 0.0
        %516 = vmatprep.subr.mxu0 0.0
        %517 = vmatpush1.msra.mxu0 0.0
        %518 = vmatprep.subr.mxu0 0.0
        %519 = vmatpush1.msra.mxu0 0.0
        %520 = vmatprep.subr.mxu0 0.0
        %521 = vmatpush1.msra.mxu0 0.0
        %522 = vmatprep.subr.mxu0 0.0
        %523 = vmatpush1.msra.mxu0 0.0
        %524 = vmatprep.subr.mxu0 0.0
        %525 = vmatpush1.msra.mxu0 0.0
        %526 = vmatprep.subr.mxu0 0.0
        %527 = vmatpush1.msra.mxu0 0.0
        %528 = vmatprep.subr.mxu0 0.0
        %529 = vmatpush1.msra.mxu0 0.0
        %530 = vmatprep.subr.mxu0 0.0
        %531 = vmatpush1.msra.mxu0 0.0
        %532 = vmatprep.subr.mxu0 0.0
        %533 = vmatpush1.msra.mxu0 0.0
        %534 = vmatprep.subr.mxu0 0.0
        %535 = vmatpush1.msra.mxu0 0.0
        %536 = vmatprep.subr.mxu0 0.0
        %537 = vmatpush1.msra.mxu0 0.0
        %538 = vmatprep.subr.mxu0 0.0
        %539 = vmatpush1.msra.mxu0 0.0
        %540 = vmatprep.subr.mxu0 0.0
        %541 = vmatpush1.msra.mxu0 0.0
        %542 = vmatprep.subr.mxu0 0.0
        %543 = vmatpush1.msra.mxu0 0.0
        %544 = vmatprep.subr.mxu0 0.0
        %545 = vmatpush1.msra.mxu0 0.0
        %546 = vmatprep.subr.mxu0 0.0
        %547 = vmatpush1.msra.mxu0 0.0
        %548 = vmatprep.mubr.f32.mxu0 0.0
        %549 = vmatmul.mubr.f32.gmra.mrb[0].mxu0 %v482
        %v550 = vpop.f32.mrb[0].mxu0
        %v551 = vadd.f32 0.0, %v550
        %v552 = vpop.f32.mrb[0].mxu0
        %553 = vdwg.mxu0
        %v555 = vsel %vm261, %v193, 0
        %557 = vmatprep.subr.mxu0 0.0
        %558 = vmatpush1.msra.mxu0 %v229
        %559 = vmatprep.subr.mxu0 0.0
        %560 = vmatpush1.msra.mxu0 %v230
        %561 = vmatprep.subr.mxu0 0.0
        %562 = vmatpush1.msra.mxu0 %v231
        %563 = vmatprep.subr.mxu0 0.0
        %564 = vmatpush1.msra.mxu0 %v232
        %565 = vmatprep.subr.mxu0 0.0
        %566 = vmatpush1.msra.mxu0 %v233
        %567 = vmatprep.subr.mxu0 0.0
        %568 = vmatpush1.msra.mxu0 %v234
        %569 = vmatprep.subr.mxu0 0.0
        %570 = vmatpush1.msra.mxu0 %v235
        %571 = vmatprep.subr.mxu0 0.0
        %572 = vmatpush1.msra.mxu0 %v236
        %573 = vmatprep.subr.mxu0 0.0
        %574 = vmatpush1.msra.mxu0 0.0
        %575 = vmatprep.subr.mxu0 0.0
        %576 = vmatpush1.msra.mxu0 0.0
        %577 = vmatprep.subr.mxu0 0.0
        %578 = vmatpush1.msra.mxu0 0.0
        %579 = vmatprep.subr.mxu0 0.0
        %580 = vmatpush1.msra.mxu0 0.0
        %581 = vmatprep.subr.mxu0 0.0
        %582 = vmatpush1.msra.mxu0 0.0
        %583 = vmatprep.subr.mxu0 0.0
        %584 = vmatpush1.msra.mxu0 0.0
        %585 = vmatprep.subr.mxu0 0.0
        %586 = vmatpush1.msra.mxu0 0.0
        %587 = vmatprep.subr.mxu0 0.0
        %588 = vmatpush1.msra.mxu0 0.0
        %589 = vmatprep.subr.mxu0 0.0
        %590 = vmatpush1.msra.mxu0 0.0
        %591 = vmatprep.subr.mxu0 0.0
        %592 = vmatpush1.msra.mxu0 0.0
        %593 = vmatprep.subr.mxu0 0.0
        %594 = vmatpush1.msra.mxu0 0.0
        %595 = vmatprep.subr.mxu0 0.0
        %596 = vmatpush1.msra.mxu0 0.0
        %597 = vmatprep.subr.mxu0 0.0
        %598 = vmatpush1.msra.mxu0 0.0
        %599 = vmatprep.subr.mxu0 0.0
        %600 = vmatpush1.msra.mxu0 0.0
        %601 = vmatprep.subr.mxu0 0.0
        %602 = vmatpush1.msra.mxu0 0.0
        %603 = vmatprep.subr.mxu0 0.0
        %604 = vmatpush1.msra.mxu0 0.0
        %605 = vmatprep.subr.mxu0 0.0
        %606 = vmatpush1.msra.mxu0 0.0
        %607 = vmatprep.subr.mxu0 0.0
        %608 = vmatpush1.msra.mxu0 0.0
        %609 = vmatprep.subr.mxu0 0.0
        %610 = vmatpush1.msra.mxu0 0.0
        %611 = vmatprep.subr.mxu0 0.0
        %612 = vmatpush1.msra.mxu0 0.0
        %613 = vmatprep.subr.mxu0 0.0
        %614 = vmatpush1.msra.mxu0 0.0
        %615 = vmatprep.subr.mxu0 0.0
        %616 = vmatpush1.msra.mxu0 0.0
        %617 = vmatprep.subr.mxu0 0.0
        %618 = vmatpush1.msra.mxu0 0.0
        %619 = vmatprep.subr.mxu0 0.0
        %620 = vmatpush1.msra.mxu0 0.0
        %621 = vmatprep.mubr.f32.mxu0 0.0
        %622 = vmatmul.mubr.f32.gmra.mrb[0].mxu0 %v555
        %v623 = vpop.f32.mrb[0].mxu0
        %v624 = vadd.f32 0.0, %v623
        %v625 = vpop.f32.mrb[0].mxu0
        %626 = vdwg.mxu0
        %v628 = vsel %vm261, %v194, 0
        %630 = vmatprep.subr.mxu0 0.0
        %631 = vmatpush1.msra.mxu0 %v237
        %632 = vmatprep.subr.mxu0 0.0
        %633 = vmatpush1.msra.mxu0 %v238
        %634 = vmatprep.subr.mxu0 0.0
        %635 = vmatpush1.msra.mxu0 %v239
        %636 = vmatprep.subr.mxu0 0.0
        %637 = vmatpush1.msra.mxu0 %v240
        %638 = vmatprep.subr.mxu0 0.0
        %639 = vmatpush1.msra.mxu0 %v241
        %640 = vmatprep.subr.mxu0 0.0
        %641 = vmatpush1.msra.mxu0 %v242
        %642 = vmatprep.subr.mxu0 0.0
        %643 = vmatpush1.msra.mxu0 %v243
        %644 = vmatprep.subr.mxu0 0.0
        %645 = vmatpush1.msra.mxu0 %v244
        %646 = vmatprep.subr.mxu0 0.0
        %647 = vmatpush1.msra.mxu0 0.0
        %648 = vmatprep.subr.mxu0 0.0
        %649 = vmatpush1.msra.mxu0 0.0
        %650 = vmatprep.subr.mxu0 0.0
        %651 = vmatpush1.msra.mxu0 0.0
        %652 = vmatprep.subr.mxu0 0.0
        %653 = vmatpush1.msra.mxu0 0.0
        %654 = vmatprep.subr.mxu0 0.0
        %655 = vmatpush1.msra.mxu0 0.0
        %656 = vmatprep.subr.mxu0 0.0
        %657 = vmatpush1.msra.mxu0 0.0
        %658 = vmatprep.subr.mxu0 0.0
        %659 = vmatpush1.msra.mxu0 0.0
        %660 = vmatprep.subr.mxu0 0.0
        %661 = vmatpush1.msra.mxu0 0.0
        %662 = vmatprep.subr.mxu0 0.0
        %663 = vmatpush1.msra.mxu0 0.0
        %664 = vmatprep.subr.mxu0 0.0
        %665 = vmatpush1.msra.mxu0 0.0
        %666 = vmatprep.subr.mxu0 0.0
        %667 = vmatpush1.msra.mxu0 0.0
        %668 = vmatprep.subr.mxu0 0.0
        %669 = vmatpush1.msra.mxu0 0.0
        %670 = vmatprep.subr.mxu0 0.0
        %671 = vmatpush1.msra.mxu0 0.0
        %672 = vmatprep.subr.mxu0 0.0
        %673 = vmatpush1.msra.mxu0 0.0
        %674 = vmatprep.subr.mxu0 0.0
        %675 = vmatpush1.msra.mxu0 0.0
        %676 = vmatprep.subr.mxu0 0.0
        %677 = vmatpush1.msra.mxu0 0.0
        %678 = vmatprep.subr.mxu0 0.0
        %679 = vmatpush1.msra.mxu0 0.0
        %680 = vmatprep.subr.mxu0 0.0
        %681 = vmatpush1.msra.mxu0 0.0
        %682 = vmatprep.subr.mxu0 0.0
        %683 = vmatpush1.msra.mxu0 0.0
        %684 = vmatprep.subr.mxu0 0.0
        %685 = vmatpush1.msra.mxu0 0.0
        %686 = vmatprep.subr.mxu0 0.0
        %687 = vmatpush1.msra.mxu0 0.0
        %688 = vmatprep.subr.mxu0 0.0
        %689 = vmatpush1.msra.mxu0 0.0
        %690 = vmatprep.subr.mxu0 0.0
        %691 = vmatpush1.msra.mxu0 0.0
        %692 = vmatprep.subr.mxu0 0.0
        %693 = vmatpush1.msra.mxu0 0.0
        %694 = vmatprep.mubr.f32.mxu0 0.0
        %695 = vmatmul.mubr.f32.gmra.mrb[0].mxu0 %v628
        %v696 = vpop.f32.mrb[0].mxu0
        %v697 = vadd.f32 0.0, %v696
        %v698 = vpop.f32.mrb[0].mxu0
        %699 = vdwg.mxu0
        %v701 = vsel %vm261, %v195, 0
        %703 = vmatprep.subr.mxu0 0.0
        %704 = vmatpush1.msra.mxu0 %v245
        %705 = vmatprep.subr.mxu0 0.0
        %706 = vmatpush1.msra.mxu0 %v246
        %707 = vmatprep.subr.mxu0 0.0
        %708 = vmatpush1.msra.mxu0 %v247
        %709 = vmatprep.subr.mxu0 0.0
        %710 = vmatpush1.msra.mxu0 %v248
        %711 = vmatprep.subr.mxu0 0.0
        %712 = vmatpush1.msra.mxu0 %v249
        %713 = vmatprep.subr.mxu0 0.0
        %714 = vmatpush1.msra.mxu0 %v250
        %715 = vmatprep.subr.mxu0 0.0
        %716 = vmatpush1.msra.mxu0 %v251
        %717 = vmatprep.subr.mxu0 0.0
        %718 = vmatpush1.msra.mxu0 %v252
        %719 = vmatprep.subr.mxu0 0.0
        %720 = vmatpush1.msra.mxu0 0.0
        %721 = vmatprep.subr.mxu0 0.0
        %722 = vmatpush1.msra.mxu0 0.0
        %723 = vmatprep.subr.mxu0 0.0
        %724 = vmatpush1.msra.mxu0 0.0
        %725 = vmatprep.subr.mxu0 0.0
        %726 = vmatpush1.msra.mxu0 0.0
        %727 = vmatprep.subr.mxu0 0.0
        %728 = vmatpush1.msra.mxu0 0.0
        %729 = vmatprep.subr.mxu0 0.0
        %730 = vmatpush1.msra.mxu0 0.0
        %731 = vmatprep.subr.mxu0 0.0
        %732 = vmatpush1.msra.mxu0 0.0
        %733 = vmatprep.subr.mxu0 0.0
        %734 = vmatpush1.msra.mxu0 0.0
        %735 = vmatprep.subr.mxu0 0.0
        %736 = vmatpush1.msra.mxu0 0.0
        %737 = vmatprep.subr.mxu0 0.0
        %738 = vmatpush1.msra.mxu0 0.0
        %739 = vmatprep.subr.mxu0 0.0
        %740 = vmatpush1.msra.mxu0 0.0
        %741 = vmatprep.subr.mxu0 0.0
        %742 = vmatpush1.msra.mxu0 0.0
        %743 = vmatprep.subr.mxu0 0.0
        %744 = vmatpush1.msra.mxu0 0.0
        %745 = vmatprep.subr.mxu0 0.0
        %746 = vmatpush1.msra.mxu0 0.0
        %747 = vmatprep.subr.mxu0 0.0
        %748 = vmatpush1.msra.mxu0 0.0
        %749 = vmatprep.subr.mxu0 0.0
        %750 = vmatpush1.msra.mxu0 0.0
        %751 = vmatprep.subr.mxu0 0.0
        %752 = vmatpush1.msra.mxu0 0.0
        %753 = vmatprep.subr.mxu0 0.0
        %754 = vmatpush1.msra.mxu0 0.0
        %755 = vmatprep.subr.mxu0 0.0
        %756 = vmatpush1.msra.mxu0 0.0
        %757 = vmatprep.subr.mxu0 0.0
        %758 = vmatpush1.msra.mxu0 0.0
        %759 = vmatprep.subr.mxu0 0.0
        %760 = vmatpush1.msra.mxu0 0.0
        %761 = vmatprep.subr.mxu0 0.0
        %762 = vmatpush1.msra.mxu0 0.0
        %763 = vmatprep.subr.mxu0 0.0
        %764 = vmatpush1.msra.mxu0 0.0
        %765 = vmatprep.subr.mxu0 0.0
        %766 = vmatpush1.msra.mxu0 0.0
        %767 = vmatprep.mubr.f32.mxu0 0.0
        %768 = vmatmul.mubr.f32.gmra.mrb[0].mxu0 %v701
        %v769 = vpop.f32.mrb[0].mxu0
        %v770 = vadd.f32 0.0, %v769
        %v771 = vpop.f32.mrb[0].mxu0
        %772 = vdwg.mxu0
        %v774 = vsel %vm261, %v196, 0
        %776 = vmatprep.subr.mxu0 0.0
        %777 = vmatpush1.msra.mxu0 %v253
        %778 = vmatprep.subr.mxu0 0.0
        %779 = vmatpush1.msra.mxu0 %v254
        %780 = vmatprep.subr.mxu0 0.0
        %781 = vmatpush1.msra.mxu0 %v255
        %782 = vmatprep.subr.mxu0 0.0
        %783 = vmatpush1.msra.mxu0 %v256
        %784 = vmatprep.subr.mxu0 0.0
        %785 = vmatpush1.msra.mxu0 %v257
        %786 = vmatprep.subr.mxu0 0.0
        %787 = vmatpush1.msra.mxu0 %v258
        %788 = vmatprep.subr.mxu0 0.0
        %789 = vmatpush1.msra.mxu0 %v259
        %790 = vmatprep.subr.mxu0 0.0
        %791 = vmatpush1.msra.mxu0 %v260
        %792 = vmatprep.subr.mxu0 0.0
        %793 = vmatpush1.msra.mxu0 0.0
        %794 = vmatprep.subr.mxu0 0.0
        %795 = vmatpush1.msra.mxu0 0.0
        %796 = vmatprep.subr.mxu0 0.0
        %797 = vmatpush1.msra.mxu0 0.0
        %798 = vmatprep.subr.mxu0 0.0
        %799 = vmatpush1.msra.mxu0 0.0
        %800 = vmatprep.subr.mxu0 0.0
        %801 = vmatpush1.msra.mxu0 0.0
        %802 = vmatprep.subr.mxu0 0.0
        %803 = vmatpush1.msra.mxu0 0.0
        %804 = vmatprep.subr.mxu0 0.0
        %805 = vmatpush1.msra.mxu0 0.0
        %806 = vmatprep.subr.mxu0 0.0
        %807 = vmatpush1.msra.mxu0 0.0
        %808 = vmatprep.subr.mxu0 0.0
        %809 = vmatpush1.msra.mxu0 0.0
        %810 = vmatprep.subr.mxu0 0.0
        %811 = vmatpush1.msra.mxu0 0.0
        %812 = vmatprep.subr.mxu0 0.0
        %813 = vmatpush1.msra.mxu0 0.0
        %814 = vmatprep.subr.mxu0 0.0
        %815 = vmatpush1.msra.mxu0 0.0
        %816 = vmatprep.subr.mxu0 0.0
        %817 = vmatpush1.msra.mxu0 0.0
        %818 = vmatprep.subr.mxu0 0.0
        %819 = vmatpush1.msra.mxu0 0.0
        %820 = vmatprep.subr.mxu0 0.0
        %821 = vmatpush1.msra.mxu0 0.0
        %822 = vmatprep.subr.mxu0 0.0
        %823 = vmatpush1.msra.mxu0 0.0
        %824 = vmatprep.subr.mxu0 0.0
        %825 = vmatpush1.msra.mxu0 0.0
        %826 = vmatprep.subr.mxu0 0.0
        %827 = vmatpush1.msra.mxu0 0.0
        %828 = vmatprep.subr.mxu0 0.0
        %829 = vmatpush1.msra.mxu0 0.0
        %830 = vmatprep.subr.mxu0 0.0
        %831 = vmatpush1.msra.mxu0 0.0
        %832 = vmatprep.subr.mxu0 0.0
        %833 = vmatpush1.msra.mxu0 0.0
        %834 = vmatprep.subr.mxu0 0.0
        %835 = vmatpush1.msra.mxu0 0.0
        %836 = vmatprep.subr.mxu0 0.0
        %837 = vmatpush1.msra.mxu0 0.0
        %838 = vmatprep.subr.mxu0 0.0
        %839 = vmatpush1.msra.mxu0 0.0
        %840 = vmatprep.mubr.f32.mxu0 0.0
        %841 = vmatmul.mubr.f32.gmra.mrb[0].mxu0 %v774
        %v842 = vpop.f32.mrb[0].mxu0
        %v843 = vadd.f32 0.0, %v842
        %v844 = vpop.f32.mrb[0].mxu0
        %845 = vdwg.mxu0
        %846 = vst [vmem:[%s187] sm:$0xf] %v332
        %847 = vst [vmem:[%s187 + $0x4] sm:$0xf] %v405
        %848 = vst [vmem:[%s187 + $0x8] sm:$0xf] %v478
        %849 = vst [vmem:[%s187 + $0xc] sm:$0xf] %v551
        %850 = vst [vmem:[%s187 + $0x10] sm:$0xf] %v624
        %851 = vst [vmem:[%s187 + $0x14] sm:$0xf] %v697
        %852 = vst [vmem:[%s187 + $0x18] sm:$0xf] %v770
        %853 = vst [vmem:[%s187 + $0x1c] sm:$0xf] %v843
        %s854 = smul.u32 8, %s16
        %p855 = scmp.lt.s32.totalorder %s854, 15
        %s856 = scalar_select %p855, %s854, 15
        %s857 = smul.addr %s856, 4
        %s858 = scalar_lea.vmem %s2, %s857
        // Predicated region
        $region33: #{separate_fcs.1} parent=27 // pred_check
          %p859 = pneg %p86
        $region34: #{separate_fcs.1} parent=27 // pred_check_branch
          %861 = sbr.rel (%p859) target = $region36
        $region35: #{separate_fcs.1} parent=27 // pred_region
          %s862 = smul.u32 8, %s16
        $region36: #{separate_fcs.1} parent=27 // pred_fallthru
          _
      $region28: #{separate_fcs.1} parent=5 // pred_fallthru
        _
      %p863 = scmp.le.s32.totalorder 2, %s11
      // Predicated region
      $region37: #{separate_fcs.1} parent=5 // pred_check
        %p864 = pneg %p863
      $region38: #{separate_fcs.1} parent=5 // pred_check_branch
        %866 = sbr.rel (%p864) target = $region40
      $region39: #{separate_fcs.1} parent=5 // pred_region
        %s867 = ssub.s32 %s11, 2
        // Predicated region
        $region41: #{separate_fcs.1} parent=39 // pred_check
          %p868 = pneg %p92
        $region42: #{separate_fcs.1} parent=39 // pred_check_branch
          %870 = sbr.rel (%p868) target = $region44
        $region43: #{separate_fcs.1} parent=39 // pred_region
          %s871 = smul.u32 8, %s17
          %p872 = scmp.lt.s32.totalorder %s871, 15
          %s873 = scalar_select %p872, %s871, 15
          %s874 = smul.addr %s873, 4
          %s875 = scalar_lea.vmem %s2, %s874
        $region44: #{separate_fcs.1} parent=39 // pred_fallthru
          _
      $region40: #{separate_fcs.1} parent=5 // pred_fallthru
        _
    $region6: #{separate_fcs.1} parent=1 // loop_footer
      %s15 = sadd.s32 1, %s11
    $region7: #{separate_fcs.1} parent=1 // loop_footer_branch
      %10 = sbr.rel target = $region3
    $region8: #{separate_fcs.1} parent=1 // loop_exit
      _
    %876 = vsyncpa [#allocation3], 1
    %s877 = scalar_lea.sflag [#allocation3], 1
    %878 = vsyncpa %s877, 1

</llo_original>
